<compile_context>
chip_gen: v7x
topology: tpu7x:2x2x1
jax: 0.10.0
libtpu: 0.0.40
codegen_flags: <defaults>
</compile_context>

<pallas_src>
import functools

import jax
import jax.numpy as jnp
from jax.experimental import pallas as pl
from jax.experimental.pallas import tpu as pltpu

LANE = 128     # TPU lane width
SUBLANE = 8    # TPU sublane granularity


def _round_up(x, m):
    return ((x + m - 1) // m) * m


def _cdiv(a, b):
    return (a + b - 1) // b


def dqn_kernel(x_ref, w1_ref, b1_ref, w2_ref, b2_ref, w3_ref, b3_ref, o_ref):
    # One batch tile per grid step; weights/biases stay VMEM-resident across steps.
    x = x_ref[...].astype(jnp.bfloat16)                               # in-kernel f32->bf16
    h1 = jnp.dot(x, w1_ref[...], preferred_element_type=jnp.float32) + b1_ref[...]
    h1 = jnp.maximum(h1, 0.0).astype(jnp.bfloat16)                    # relu(fc1)
    h2 = jnp.dot(h1, w2_ref[...], preferred_element_type=jnp.float32) + b2_ref[...]
    h2 = jnp.maximum(h2, 0.0).astype(jnp.bfloat16)                    # relu(fc2)
    out = jnp.dot(h2, w3_ref[...], preferred_element_type=jnp.float32) + b3_ref[...]
    o_ref[...] = out.astype(o_ref.dtype)                              # fc3, stored bf16


def prepare_dqn_params(params):
    """One-time static prep: bf16 weights, fc3 weight/bias padded to a 128-lane multiple."""
    w1, b1, w2, b2, w3, b3 = params
    A = w3.shape[1]
    A_pad = _round_up(A, LANE)
    w1b = w1.astype(jnp.bfloat16)
    w2b = w2.astype(jnp.bfloat16)
    w3b = w3.astype(jnp.bfloat16)
    b1 = b1.astype(jnp.float32)
    b2 = b2.astype(jnp.float32)
    b3 = b3.astype(jnp.float32)
    if A_pad != A:
        w3b = jnp.pad(w3b, ((0, 0), (0, A_pad - A)))
        b3 = jnp.pad(b3, ((0, 0), (0, A_pad - A)))
    return (w1b, b1, w2b, b2, w3b, b3)


@functools.partial(jax.jit, static_argnames=("action_size", "tile_b"))
def dqn_forward(x, prepared_params, *, action_size, tile_b=2048):
    """x: (B, *state_size) float32. Returns (B, action_size) float32."""
    w1b, b1, w2b, b2, w3b, b3 = prepared_params
    B = x.shape[0]
    x2d = x.reshape(B, -1)                                            # x.view(x.size(0), -1)
    D = x2d.shape[1]
    H = w1b.shape[1]
    A_pad = w3b.shape[1]

    # Batch tile: sublane-aligned for tiny batches, capped at tile_b for huge ones.
    TB = min(tile_b, _round_up(B, SUBLANE))
    # Guarantee >= 2 grid steps for large batches so "parallel" can split across v7x's 2 TCs.
    if B >= 2 * LANE and _cdiv(B, TB) < 2:
        TB = _round_up(_cdiv(B, 2), LANE)
    grid = (_cdiv(B, TB),)                                            # partial last tile OK

    resident = lambda shape: pl.BlockSpec(shape, lambda i: (0, 0))    # weights stay put

    out = pl.pallas_call(
        dqn_kernel,
        out_shape=jax.ShapeDtypeStruct((B, A_pad), jnp.bfloat16),
        grid=grid,
        in_specs=[
            pl.BlockSpec((TB, D), lambda i: (i, 0)),                  # activations: batch-tiled
            resident((D, H)), resident((1, H)),                       # fc1
            resident((H, H)), resident((1, H)),                       # fc2
            resident((H, A_pad)), resident((1, A_pad)),               # fc3 (lane-padded)
        ],
        out_specs=pl.BlockSpec((TB, A_pad), lambda i: (i, 0)),
        compiler_params=pltpu.CompilerParams(
            dimension_semantics=("parallel",),                        # shard batch on v7x
        ),
    )(x2d, w1b, b1, w2b, b2, w3b, b3)

    return out[:, :action_size].astype(jnp.float32)


def init_dqn_params(key, state_size, action_size, hidden=128):
    """Deterministic synthetic init (uniform, PyTorch-Linear-style bounds), f32 master copy."""
    input_size = 1
    for s in state_size:
        input_size *= s
    keys = jax.random.split(key, 6)

    def lin(kw, kb, fan_in, fan_out):
        bound = 1.0 / jnp.sqrt(jnp.float32(fan_in))
        w = jax.random.uniform(kw, (fan_in, fan_out), jnp.float32, -bound, bound)
        b = jax.random.uniform(kb, (1, fan_out), jnp.float32, -bound, bound)
        return w, b

    w1, b1 = lin(keys[0], keys[1], input_size, hidden)
    w2, b2 = lin(keys[2], keys[3], hidden, hidden)
    w3, b3 = lin(keys[4], keys[5], hidden, action_size)
    return (w1, b1, w2, b2, w3, b3)


if __name__ == "__main__":
    key = jax.random.PRNGKey(0)
    k_param, k_x = jax.random.split(key)

    state_size = (4, 16)      # input_size = np.prod(state_size) = 64
    action_size = 8
    batch = 2

    params = init_dqn_params(k_param, state_size, action_size)
    prepared = prepare_dqn_params(params)                             # one-time static prep
    x = jax.random.normal(k_x, (batch,) + state_size, dtype=jnp.float32)

    out = dqn_forward(x, prepared, action_size=action_size)
    out = jax.block_until_ready(out)

    # Pure-JAX reference matching the kernel math (bf16 operands, f32 acc, bf16 output).
    w1, b1, w2, b2, w3, b3 = params
    xb = x.reshape(batch, -1).astype(jnp.bfloat16)
    h = jnp.dot(xb, w1.astype(jnp.bfloat16), preferred_element_type=jnp.float32) + b1
    h = jnp.maximum(h, 0.0).astype(jnp.bfloat16)
    h = jnp.dot(h, w2.astype(jnp.bfloat16), preferred_element_type=jnp.float32) + b2
    h = jnp.maximum(h, 0.0).astype(jnp.bfloat16)
    ref = jnp.dot(h, w3.astype(jnp.bfloat16), preferred_element_type=jnp.float32) + b3
    ref = ref.astype(jnp.bfloat16).astype(jnp.float32)

    assert out.shape == (batch, action_size)
    # bf16 operands + bf16 output => tolerance sized for bf16 ULP, per review note.
    assert jnp.allclose(out, ref, atol=2e-2, rtol=2e-2), (
        f"max abs err = {jnp.max(jnp.abs(out - ref))}")

    print("KERNEL_OK")
</pallas_src>

<mosaic_0001>
module attributes {stable_mosaic.version = 11 : i64} {
  func.func @dqn_kernel(%arg0: i32, %arg1: memref<8x64xf32, #tpu.memory_space<vmem>>, %arg2: memref<64x128xbf16, #tpu.memory_space<vmem>>, %arg3: memref<1x128xf32, #tpu.memory_space<vmem>>, %arg4: memref<128x128xbf16, #tpu.memory_space<vmem>>, %arg5: memref<1x128xf32, #tpu.memory_space<vmem>>, %arg6: memref<128x128xbf16, #tpu.memory_space<vmem>>, %arg7: memref<1x128xf32, #tpu.memory_space<vmem>>, %arg8: memref<8x128xbf16, #tpu.memory_space<vmem>>) attributes {dimension_semantics = [#tpu.dimension_semantics<parallel>], iteration_bounds = array<i64: 1>, scalar_prefetch = 0 : i64, scratch_operands = 0 : i64, tpu.core_type = #tpu.core_type<tc>, window_params = [{transform_indices = @transform_0, window_bounds = array<i64: 8, 64>}, {pipeline_mode = #tpu.pipeline_mode<synchronous>, transform_indices = @transform_1, window_bounds = array<i64: 64, 128>}, {pipeline_mode = #tpu.pipeline_mode<synchronous>, transform_indices = @transform_2, window_bounds = array<i64: 1, 128>}, {pipeline_mode = #tpu.pipeline_mode<synchronous>, transform_indices = @transform_3, window_bounds = array<i64: 128, 128>}, {pipeline_mode = #tpu.pipeline_mode<synchronous>, transform_indices = @transform_4, window_bounds = array<i64: 1, 128>}, {pipeline_mode = #tpu.pipeline_mode<synchronous>, transform_indices = @transform_5, window_bounds = array<i64: 128, 128>}, {pipeline_mode = #tpu.pipeline_mode<synchronous>, transform_indices = @transform_6, window_bounds = array<i64: 1, 128>}, {transform_indices = @transform_7, window_bounds = array<i64: 8, 128>}]} {
    %c0 = arith.constant 0 : index
    %c0_0 = arith.constant 0 : index
    %0 = vector.load %arg1[%c0, %c0_0] : memref<8x64xf32, #tpu.memory_space<vmem>>, vector<8x64xf32>
    %1 = arith.truncf %0 : vector<8x64xf32> to vector<8x64xbf16>
    %c0_1 = arith.constant 0 : index
    %c0_2 = arith.constant 0 : index
    %2 = vector.load %arg2[%c0_1, %c0_2] : memref<64x128xbf16, #tpu.memory_space<vmem>>, vector<64x128xbf16>
    %cst = arith.constant dense<0.000000e+00> : vector<8x128xf32>
    %3 = tpu.matmul %1, %2, %cst {dimension_numbers = #tpu.dot_dimension_numbers<[1], [0], [0], [1], [0, 0, 1, 1], [], []>} : vector<8x64xbf16>, vector<64x128xbf16>, vector<8x128xf32> -> vector<8x128xf32>
    %c0_3 = arith.constant 0 : index
    %c0_4 = arith.constant 0 : index
    %4 = vector.load %arg3[%c0_3, %c0_4] : memref<1x128xf32, #tpu.memory_space<vmem>>, vector<1x128xf32>
    %5 = vector.broadcast %4 : vector<1x128xf32> to vector<8x128xf32>
    %6 = arith.addf %3, %5 : vector<8x128xf32>
    %cst_5 = arith.constant 0.000000e+00 : f32
    %7 = vector.broadcast %cst_5 : f32 to vector<8x128xf32>
    %8 = arith.maximumf %6, %7 : vector<8x128xf32>
    %9 = arith.truncf %8 : vector<8x128xf32> to vector<8x128xbf16>
    %c0_6 = arith.constant 0 : index
    %c0_7 = arith.constant 0 : index
    %10 = vector.load %arg4[%c0_6, %c0_7] : memref<128x128xbf16, #tpu.memory_space<vmem>>, vector<128x128xbf16>
    %cst_8 = arith.constant dense<0.000000e+00> : vector<8x128xf32>
    %11 = tpu.matmul %9, %10, %cst_8 {dimension_numbers = #tpu.dot_dimension_numbers<[1], [0], [0], [1], [0, 0, 1, 1], [], []>} : vector<8x128xbf16>, vector<128x128xbf16>, vector<8x128xf32> -> vector<8x128xf32>
    %c0_9 = arith.constant 0 : index
    %c0_10 = arith.constant 0 : index
    %12 = vector.load %arg5[%c0_9, %c0_10] : memref<1x128xf32, #tpu.memory_space<vmem>>, vector<1x128xf32>
    %13 = vector.broadcast %12 : vector<1x128xf32> to vector<8x128xf32>
    %14 = arith.addf %11, %13 : vector<8x128xf32>
    %cst_11 = arith.constant 0.000000e+00 : f32
    %15 = vector.broadcast %cst_11 : f32 to vector<8x128xf32>
    %16 = arith.maximumf %14, %15 : vector<8x128xf32>
    %17 = arith.truncf %16 : vector<8x128xf32> to vector<8x128xbf16>
    %c0_12 = arith.constant 0 : index
    %c0_13 = arith.constant 0 : index
    %18 = vector.load %arg6[%c0_12, %c0_13] : memref<128x128xbf16, #tpu.memory_space<vmem>>, vector<128x128xbf16>
    %cst_14 = arith.constant dense<0.000000e+00> : vector<8x128xf32>
    %19 = tpu.matmul %17, %18, %cst_14 {dimension_numbers = #tpu.dot_dimension_numbers<[1], [0], [0], [1], [0, 0, 1, 1], [], []>} : vector<8x128xbf16>, vector<128x128xbf16>, vector<8x128xf32> -> vector<8x128xf32>
    %c0_15 = arith.constant 0 : index
    %c0_16 = arith.constant 0 : index
    %20 = vector.load %arg7[%c0_15, %c0_16] : memref<1x128xf32, #tpu.memory_space<vmem>>, vector<1x128xf32>
    %21 = vector.broadcast %20 : vector<1x128xf32> to vector<8x128xf32>
    %22 = arith.addf %19, %21 : vector<8x128xf32>
    %23 = arith.truncf %22 : vector<8x128xf32> to vector<8x128xbf16>
    %c0_17 = arith.constant 0 : index
    %c0_18 = arith.constant 0 : index
    %24 = vector.load %arg8[%c0_17, %c0_18] : memref<8x128xbf16, #tpu.memory_space<vmem>>, vector<8x128xbf16>
    tpu.vector_store %arg8[%c0_17, %c0_18], %23 {strides = array<i32>} : memref<8x128xbf16, #tpu.memory_space<vmem>>, vector<8x128xbf16>,
    return
  }
  func.func @transform_0(%arg0: i32) -> (i32, i32) {
    %c0_i32 = arith.constant 0 : i32
    %c0_i32_0 = arith.constant 0 : i32
    return %arg0, %c0_i32 : i32, i32
  }
  func.func @transform_1(%arg0: i32) -> (i32, i32) {
    %c0_i32 = arith.constant 0 : i32
    %c0_i32_0 = arith.constant 0 : i32
    %c0_i32_1 = arith.constant 0 : i32
    return %c0_i32, %c0_i32_0 : i32, i32
  }
  func.func @transform_2(%arg0: i32) -> (i32, i32) {
    %c0_i32 = arith.constant 0 : i32
    %c0_i32_0 = arith.constant 0 : i32
    %c0_i32_1 = arith.constant 0 : i32
    return %c0_i32, %c0_i32_0 : i32, i32
  }
  func.func @transform_3(%arg0: i32) -> (i32, i32) {
    %c0_i32 = arith.constant 0 : i32
    %c0_i32_0 = arith.constant 0 : i32
    %c0_i32_1 = arith.constant 0 : i32
    return %c0_i32, %c0_i32_0 : i32, i32
  }
  func.func @transform_4(%arg0: i32) -> (i32, i32) {
    %c0_i32 = arith.constant 0 : i32
    %c0_i32_0 = arith.constant 0 : i32
    %c0_i32_1 = arith.constant 0 : i32
    return %c0_i32, %c0_i32_0 : i32, i32
  }
  func.func @transform_5(%arg0: i32) -> (i32, i32) {
    %c0_i32 = arith.constant 0 : i32
    %c0_i32_0 = arith.constant 0 : i32
    %c0_i32_1 = arith.constant 0 : i32
    return %c0_i32, %c0_i32_0 : i32, i32
  }
  func.func @transform_6(%arg0: i32) -> (i32, i32) {
    %c0_i32 = arith.constant 0 : i32
    %c0_i32_0 = arith.constant 0 : i32
    %c0_i32_1 = arith.constant 0 : i32
    return %c0_i32, %c0_i32_0 : i32, i32
  }
  func.func @transform_7(%arg0: i32) -> (i32, i32) {
    %c0_i32 = arith.constant 0 : i32
    %c0_i32_0 = arith.constant 0 : i32
    return %arg0, %c0_i32 : i32, i32
  }
}

</mosaic_0001>

<llo_original>
// kernel: dqn_forward.1
$region0: #{dqn_forward.1}
  #allocation0 [shape = 'u32[]', space=smem, size = 0x4, offset = 0x4, fixed_abs, tag = 'smem constant byte address 0x4 - core index']
  #allocation1 [shape = 'u32[144,128]{1,0:T(1,128)}', space=vmem, size = 0x12000, scoped, tag = 'internal scratch']
  %s0 = inlined_call_operand.vmem [shape: f32[2,64], index: 0, kind: input, shape index: {}]
  %s1 = inlined_call_operand.hbm [shape: bf16[64,128], index: 1, kind: input, shape index: {}]
  %s2 = inlined_call_operand.vmem [shape: f32[1,128], index: 2, kind: input, shape index: {}]
  %s3 = inlined_call_operand.hbm [shape: bf16[128,128], index: 3, kind: input, shape index: {}]
  %s4 = inlined_call_operand.vmem [shape: f32[1,128], index: 4, kind: input, shape index: {}]
  %s5 = inlined_call_operand.hbm [shape: bf16[128,128], index: 5, kind: input, shape index: {}]
  %s6 = inlined_call_operand.vmem [shape: f32[1,128], index: 6, kind: input, shape index: {}]
  %s7 = inlined_call_operand.vmem [shape: bf16[2,128], index: 7, kind: output, shape index: {}]
  %s8 = sld [smem:[#allocation0]]
  $region80: #{dqn_forward.1} parent=0
    _
  %s10 = ssub.s32 1, %s8
  %s11 = scalar_select 0, %s10, %s8
  $region1: #{dqn_forward.1} parent=0
    #allocation2 [shape = 'u8[16384]{0}', space=vmem, size = 0x4000, scoped, tag = 'input window, operand 1, single buffered']
    #allocation3 [shape = 's32[1]{0}', space=sflag, size = 0x4, scoped, tag = 'scoped memory for dqn_forward.1']
    #allocation4 [shape = 'u8[32768]{0}', space=vmem, size = 0x8000, scoped, tag = 'input window, operand 3, single buffered']
    #allocation5 [shape = 's32[1]{0}', space=sflag, size = 0x4, scoped, tag = 'scoped memory for dqn_forward.1']
    #allocation6 [shape = 'u8[32768]{0}', space=vmem, size = 0x8000, scoped, tag = 'input window, operand 5, single buffered']
    #allocation7 [shape = 'u8[2048]{0}', space=vmem, size = 0x800, scoped, tag = 'output window, operand 0, single buffered']
    %12 = vsyncpa [#allocation3], 0
    %13 = vsyncpa [#allocation5], 0
    // Predicated region
    $region2: #{dqn_forward.1} parent=1 // pred_check
      _
    $region3: #{dqn_forward.1} parent=1 // pred_check_branch
      %15 = sbr.rel (0) target = $region5
    $region4: #{dqn_forward.1} parent=1 // pred_region
      _
    $region5: #{dqn_forward.1} parent=1 // pred_fallthru
      _
    // Predicated region
    $region6: #{dqn_forward.1} parent=1 // pred_check
      _
    $region7: #{dqn_forward.1} parent=1 // pred_check_branch
      %17 = sbr.rel (0) target = $region9
    $region8: #{dqn_forward.1} parent=1 // pred_region
      %s19 = ssub.s32 512, 512
      %20 = vsyncadd [#allocation3], %s19
      %s21 = sshll.u32 [#allocation2], 4
      %s22 = int_to_ptr.vmem [resolvable:$true] %s21
      %27 = dma.hbm_to_vmem [thread:$0]  %s1, 512, %s22, [#allocation3], 64, 64, 4
    $region9: #{dqn_forward.1} parent=1 // pred_fallthru
      _
    // Predicated region
    $region10: #{dqn_forward.1} parent=1 // pred_check
      _
    $region11: #{dqn_forward.1} parent=1 // pred_check_branch
      %29 = sbr.rel (0) target = $region13
    $region12: #{dqn_forward.1} parent=1 // pred_region
      _
    $region13: #{dqn_forward.1} parent=1 // pred_fallthru
      _
    // Predicated region
    $region14: #{dqn_forward.1} parent=1 // pred_check
      _
    $region15: #{dqn_forward.1} parent=1 // pred_check_branch
      %31 = sbr.rel (0) target = $region17
    $region16: #{dqn_forward.1} parent=1 // pred_region
      %s33 = ssub.s32 1024, 1024
      %34 = vsyncadd [#allocation5], %s33
      %s35 = sshll.u32 [#allocation4], 4
      %s36 = int_to_ptr.vmem [resolvable:$true] %s35
      %41 = dma.hbm_to_vmem [thread:$0]  %s3, 1024, %s36, [#allocation5], 64, 64, 4
    $region17: #{dqn_forward.1} parent=1 // pred_fallthru
      _
    // Predicated region
    $region18: #{dqn_forward.1} parent=1 // pred_check
      _
    $region19: #{dqn_forward.1} parent=1 // pred_check_branch
      %43 = sbr.rel (0) target = $region21
    $region20: #{dqn_forward.1} parent=1 // pred_region
      _
    $region21: #{dqn_forward.1} parent=1 // pred_fallthru
      _
    // Predicated region
    $region22: #{dqn_forward.1} parent=1 // pred_check
      _
    $region23: #{dqn_forward.1} parent=1 // pred_check_branch
      %45 = sbr.rel (0) target = $region25
    $region24: #{dqn_forward.1} parent=1 // pred_region
      %s47 = ssub.s32 1024, 1024
      %48 = vsyncadd [#allocation5], %s47
      %s49 = sshll.u32 [#allocation6], 4
      %s50 = int_to_ptr.vmem [resolvable:$true] %s49
      %55 = dma.hbm_to_vmem [thread:$0]  %s5, 1024, %s50, [#allocation5], 64, 64, 4
    $region25: #{dqn_forward.1} parent=1 // pred_fallthru
      _
    // Predicated region
    $region26: #{dqn_forward.1} parent=1 // pred_check
      _
    $region27: #{dqn_forward.1} parent=1 // pred_check_branch
      %57 = sbr.rel (0) target = $region29
    $region28: #{dqn_forward.1} parent=1 // pred_region
      _
    $region29: #{dqn_forward.1} parent=1 // pred_fallthru
      _
    // Predicated region
    $region30: #{dqn_forward.1} parent=1 // pred_check
      _
    $region31: #{dqn_forward.1} parent=1 // pred_check_branch
      %59 = sbr.rel (0) target = $region33
    $region32: #{dqn_forward.1} parent=1 // pred_region
      %60 = dma.done [#allocation3], 512
    $region33: #{dqn_forward.1} parent=1 // pred_fallthru
      _
    // Predicated region
    $region34: #{dqn_forward.1} parent=1 // pred_check
      _
    $region35: #{dqn_forward.1} parent=1 // pred_check_branch
      %62 = sbr.rel (0) target = $region37
    $region36: #{dqn_forward.1} parent=1 // pred_region
      %63 = dma.done [#allocation5], 1024
    $region37: #{dqn_forward.1} parent=1 // pred_fallthru
      _
    // Predicated region
    $region38: #{dqn_forward.1} parent=1 // pred_check
      _
    $region39: #{dqn_forward.1} parent=1 // pred_check_branch
      %65 = sbr.rel (0) target = $region41
    $region40: #{dqn_forward.1} parent=1 // pred_region
      %66 = dma.done [#allocation5], 1024
    $region41: #{dqn_forward.1} parent=1 // pred_fallthru
      _
    %v68 = vld [vmem:[%s0] sm:$0xff]
    %v69 = vpack.c.bf16 %v68, %v68
    %v70 = vld [vmem:[#allocation2] sm:$0xf]
    %v71 = vld [vmem:[#allocation2 + $0x4] sm:$0xf]
    %v72 = vld [vmem:[#allocation2 + $0x8] sm:$0xf]
    %v73 = vld [vmem:[#allocation2 + $0xc] sm:$0xf]
    %v74 = vld [vmem:[#allocation2 + $0x10] sm:$0xf]
    %v75 = vld [vmem:[#allocation2 + $0x14] sm:$0xf]
    %v76 = vld [vmem:[#allocation2 + $0x18] sm:$0xf]
    %v77 = vld [vmem:[#allocation2 + $0x1c] sm:$0xf]
    %v78 = vld [vmem:[%s2] sm:$0x1]
    %v80 = vlaneseq
    %v81 = vshrl.u32 %v80, 7
    %v82 = vsub.s32 0, %v81
    %v83 = vrot.slane %v78, %v82
    %v93 = vunpack.c.l.b16 %v70
    %v94 = vunpack.c.l.b16 %v71
    %v95 = vunpack.c.l.b16 %v72
    %v96 = vunpack.c.l.b16 %v73
    %v97 = vunpack.c.l.b16 %v74
    %v98 = vunpack.c.l.b16 %v75
    %v99 = vunpack.c.l.b16 %v76
    %v100 = vunpack.c.l.b16 %v77
    %v101 = vpack.c.b16 %v94, %v93
    %v102 = vpack.c.b16 %v96, %v95
    %v103 = vpack.c.b16 %v98, %v97
    %v104 = vpack.c.b16 %v100, %v99
    %vm109 = vcmask 523264
    %v111 = vsel %vm109, %v69, 0
    %113 = vmatprep.subr.bf16.mxu0 0
    %114 = vmatpush1.bf16.msra.mxu0 %v101
    %115 = vmatprep.subr.bf16.mxu0 0
    %116 = vmatpush1.bf16.msra.mxu0 %v102
    %117 = vmatprep.subr.bf16.mxu0 0
    %118 = vmatpush1.bf16.msra.mxu0 %v103
    %119 = vmatprep.subr.bf16.mxu0 0
    %120 = vmatpush1.bf16.msra.mxu0 %v104
    %121 = vmatprep.subr.bf16.mxu0 0
    %122 = vmatpush1.bf16.msra.mxu0 0
    %123 = vmatprep.subr.bf16.mxu0 0
    %124 = vmatpush1.bf16.msra.mxu0 0
    %125 = vmatprep.subr.bf16.mxu0 0
    %126 = vmatpush1.bf16.msra.mxu0 0
    %127 = vmatprep.subr.bf16.mxu0 0
    %128 = vmatpush1.bf16.msra.mxu0 0
    %129 = vmatprep.subr.bf16.mxu0 0
    %130 = vmatpush1.bf16.msra.mxu0 0
    %131 = vmatprep.subr.bf16.mxu0 0
    %132 = vmatpush1.bf16.msra.mxu0 0
    %133 = vmatprep.subr.bf16.mxu0 0
    %134 = vmatpush1.bf16.msra.mxu0 0
    %135 = vmatprep.subr.bf16.mxu0 0
    %136 = vmatpush1.bf16.msra.mxu0 0
    %137 = vmatprep.subr.bf16.mxu0 0
    %138 = vmatpush1.bf16.msra.mxu0 0
    %139 = vmatprep.subr.bf16.mxu0 0
    %140 = vmatpush1.bf16.msra.mxu0 0
    %141 = vmatprep.subr.bf16.mxu0 0
    %142 = vmatpush1.bf16.msra.mxu0 0
    %143 = vmatprep.subr.bf16.mxu0 0
    %144 = vmatpush1.bf16.msra.mxu0 0
    %145 = vmatprep.mubr.bf16.mxu0 0
    %146 = vmatmul.mubr.bf16.gmra.mrb[0].mxu0 %v111
    %v147 = vpop.f32.mrb[0].mxu0
    %v148 = vadd.f32 %v83, %v147
    %v149 = vpop.f32.mrb[0].mxu0
    %v150 = vpop.f32.mrb[0].mxu0
    %v151 = vpop.f32.mrb[0].mxu0
    %152 = vdwg.mxu0
    %v153 = vmax.f32 %v148, 0.0
    %v154 = vpack.c.bf16 %v153, %v153
    %v155 = vld [vmem:[#allocation4] sm:$0xf]
    %v156 = vld [vmem:[#allocation4 + $0x4] sm:$0xf]
    %v157 = vld [vmem:[#allocation4 + $0x8] sm:$0xf]
    %v158 = vld [vmem:[#allocation4 + $0xc] sm:$0xf]
    %v159 = vld [vmem:[#allocation4 + $0x10] sm:$0xf]
    %v160 = vld [vmem:[#allocation4 + $0x14] sm:$0xf]
    %v161 = vld [vmem:[#allocation4 + $0x18] sm:$0xf]
    %v162 = vld [vmem:[#allocation4 + $0x1c] sm:$0xf]
    %v163 = vld [vmem:[#allocation4 + $0x20] sm:$0xf]
    %v164 = vld [vmem:[#allocation4 + $0x24] sm:$0xf]
    %v165 = vld [vmem:[#allocation4 + $0x28] sm:$0xf]
    %v166 = vld [vmem:[#allocation4 + $0x2c] sm:$0xf]
    %v167 = vld [vmem:[#allocation4 + $0x30] sm:$0xf]
    %v168 = vld [vmem:[#allocation4 + $0x34] sm:$0xf]
    %v169 = vld [vmem:[#allocation4 + $0x38] sm:$0xf]
    %v170 = vld [vmem:[#allocation4 + $0x3c] sm:$0xf]
    %v171 = vld [vmem:[%s4] sm:$0x1]
    %v173 = vlaneseq
    %v174 = vshrl.u32 %v173, 7
    %v175 = vsub.s32 0, %v174
    %v176 = vrot.slane %v171, %v175
    %v194 = vunpack.c.l.b16 %v155
    %v195 = vunpack.c.l.b16 %v156
    %v196 = vunpack.c.l.b16 %v157
    %v197 = vunpack.c.l.b16 %v158
    %v198 = vunpack.c.l.b16 %v159
    %v199 = vunpack.c.l.b16 %v160
    %v200 = vunpack.c.l.b16 %v161
    %v201 = vunpack.c.l.b16 %v162
    %v202 = vunpack.c.l.b16 %v163
    %v203 = vunpack.c.l.b16 %v164
    %v204 = vunpack.c.l.b16 %v165
    %v205 = vunpack.c.l.b16 %v166
    %v206 = vunpack.c.l.b16 %v167
    %v207 = vunpack.c.l.b16 %v168
    %v208 = vunpack.c.l.b16 %v169
    %v209 = vunpack.c.l.b16 %v170
    %v210 = vpack.c.b16 %v195, %v194
    %v211 = vpack.c.b16 %v197, %v196
    %v212 = vpack.c.b16 %v199, %v198
    %v213 = vpack.c.b16 %v201, %v200
    %v214 = vpack.c.b16 %v203, %v202
    %v215 = vpack.c.b16 %v205, %v204
    %v216 = vpack.c.b16 %v207, %v206
    %v217 = vpack.c.b16 %v209, %v208
    %226 = vmatprep.subr.bf16.mxu0 0
    %227 = vmatpush1.bf16.msra.mxu0 %v210
    %228 = vmatprep.subr.bf16.mxu0 0
    %229 = vmatpush1.bf16.msra.mxu0 %v211
    %230 = vmatprep.subr.bf16.mxu0 0
    %231 = vmatpush1.bf16.msra.mxu0 %v212
    %232 = vmatprep.subr.bf16.mxu0 0
    %233 = vmatpush1.bf16.msra.mxu0 %v213
    %234 = vmatprep.subr.bf16.mxu0 0
    %235 = vmatpush1.bf16.msra.mxu0 %v214
    %236 = vmatprep.subr.bf16.mxu0 0
    %237 = vmatpush1.bf16.msra.mxu0 %v215
    %238 = vmatprep.subr.bf16.mxu0 0
    %239 = vmatpush1.bf16.msra.mxu0 %v216
    %240 = vmatprep.subr.bf16.mxu0 0
    %241 = vmatpush1.bf16.msra.mxu0 %v217
    %242 = vmatprep.subr.bf16.mxu0 0
    %243 = vmatpush1.bf16.msra.mxu0 0
    %244 = vmatprep.subr.bf16.mxu0 0
    %245 = vmatpush1.bf16.msra.mxu0 0
    %246 = vmatprep.subr.bf16.mxu0 0
    %247 = vmatpush1.bf16.msra.mxu0 0
    %248 = vmatprep.subr.bf16.mxu0 0
    %249 = vmatpush1.bf16.msra.mxu0 0
    %250 = vmatprep.subr.bf16.mxu0 0
    %251 = vmatpush1.bf16.msra.mxu0 0
    %252 = vmatprep.subr.bf16.mxu0 0
    %253 = vmatpush1.bf16.msra.mxu0 0
    %254 = vmatprep.subr.bf16.mxu0 0
    %255 = vmatpush1.bf16.msra.mxu0 0
    %256 = vmatprep.subr.bf16.mxu0 0
    %257 = vmatpush1.bf16.msra.mxu0 0
    %258 = vmatprep.mubr.bf16.mxu0 0
    %259 = vmatmul.mubr.bf16.gmra.mrb[0].mxu0 %v154
    %v260 = vpop.f32.mrb[0].mxu0
    %v261 = vadd.f32 %v176, %v260
    %v262 = vpop.f32.mrb[0].mxu0
    %v263 = vpop.f32.mrb[0].mxu0
    %v264 = vpop.f32.mrb[0].mxu0
    %265 = vdwg.mxu0
    %v266 = vmax.f32 %v261, 0.0
    %v267 = vpack.c.bf16 %v266, %v266
    %v268 = vld [vmem:[#allocation6] sm:$0xf]
    %v269 = vld [vmem:[#allocation6 + $0x4] sm:$0xf]
    %v270 = vld [vmem:[#allocation6 + $0x8] sm:$0xf]
    %v271 = vld [vmem:[#allocation6 + $0xc] sm:$0xf]
    %v272 = vld [vmem:[#allocation6 + $0x10] sm:$0xf]
    %v273 = vld [vmem:[#allocation6 + $0x14] sm:$0xf]
    %v274 = vld [vmem:[#allocation6 + $0x18] sm:$0xf]
    %v275 = vld [vmem:[#allocation6 + $0x1c] sm:$0xf]
    %v276 = vld [vmem:[#allocation6 + $0x20] sm:$0xf]
    %v277 = vld [vmem:[#allocation6 + $0x24] sm:$0xf]
    %v278 = vld [vmem:[#allocation6 + $0x28] sm:$0xf]
    %v279 = vld [vmem:[#allocation6 + $0x2c] sm:$0xf]
    %v280 = vld [vmem:[#allocation6 + $0x30] sm:$0xf]
    %v281 = vld [vmem:[#allocation6 + $0x34] sm:$0xf]
    %v282 = vld [vmem:[#allocation6 + $0x38] sm:$0xf]
    %v283 = vld [vmem:[#allocation6 + $0x3c] sm:$0xf]
    %v284 = vld [vmem:[%s6] sm:$0x1]
    %v286 = vlaneseq
    %v287 = vshrl.u32 %v286, 7
    %v288 = vsub.s32 0, %v287
    %v289 = vrot.slane %v284, %v288
    %v307 = vunpack.c.l.b16 %v268
    %v308 = vunpack.c.l.b16 %v269
    %v309 = vunpack.c.l.b16 %v270
    %v310 = vunpack.c.l.b16 %v271
    %v311 = vunpack.c.l.b16 %v272
    %v312 = vunpack.c.l.b16 %v273
    %v313 = vunpack.c.l.b16 %v274
    %v314 = vunpack.c.l.b16 %v275
    %v315 = vunpack.c.l.b16 %v276
    %v316 = vunpack.c.l.b16 %v277
    %v317 = vunpack.c.l.b16 %v278
    %v318 = vunpack.c.l.b16 %v279
    %v319 = vunpack.c.l.b16 %v280
    %v320 = vunpack.c.l.b16 %v281
    %v321 = vunpack.c.l.b16 %v282
    %v322 = vunpack.c.l.b16 %v283
    %v323 = vpack.c.b16 %v308, %v307
    %v324 = vpack.c.b16 %v310, %v309
    %v325 = vpack.c.b16 %v312, %v311
    %v326 = vpack.c.b16 %v314, %v313
    %v327 = vpack.c.b16 %v316, %v315
    %v328 = vpack.c.b16 %v318, %v317
    %v329 = vpack.c.b16 %v320, %v319
    %v330 = vpack.c.b16 %v322, %v321
    %339 = vmatprep.subr.bf16.mxu0 0
    %340 = vmatpush1.bf16.msra.mxu0 %v323
    %341 = vmatprep.subr.bf16.mxu0 0
    %342 = vmatpush1.bf16.msra.mxu0 %v324
    %343 = vmatprep.subr.bf16.mxu0 0
    %344 = vmatpush1.bf16.msra.mxu0 %v325
    %345 = vmatprep.subr.bf16.mxu0 0
    %346 = vmatpush1.bf16.msra.mxu0 %v326
    %347 = vmatprep.subr.bf16.mxu0 0
    %348 = vmatpush1.bf16.msra.mxu0 %v327
    %349 = vmatprep.subr.bf16.mxu0 0
    %350 = vmatpush1.bf16.msra.mxu0 %v328
    %351 = vmatprep.subr.bf16.mxu0 0
    %352 = vmatpush1.bf16.msra.mxu0 %v329
    %353 = vmatprep.subr.bf16.mxu0 0
    %354 = vmatpush1.bf16.msra.mxu0 %v330
    %355 = vmatprep.subr.bf16.mxu0 0
    %356 = vmatpush1.bf16.msra.mxu0 0
    %357 = vmatprep.subr.bf16.mxu0 0
    %358 = vmatpush1.bf16.msra.mxu0 0
    %359 = vmatprep.subr.bf16.mxu0 0
    %360 = vmatpush1.bf16.msra.mxu0 0
    %361 = vmatprep.subr.bf16.mxu0 0
    %362 = vmatpush1.bf16.msra.mxu0 0
    %363 = vmatprep.subr.bf16.mxu0 0
    %364 = vmatpush1.bf16.msra.mxu0 0
    %365 = vmatprep.subr.bf16.mxu0 0
    %366 = vmatpush1.bf16.msra.mxu0 0
    %367 = vmatprep.subr.bf16.mxu0 0
    %368 = vmatpush1.bf16.msra.mxu0 0
    %369 = vmatprep.subr.bf16.mxu0 0
    %370 = vmatpush1.bf16.msra.mxu0 0
    %371 = vmatprep.mubr.bf16.mxu0 0
    %372 = vmatmul.mubr.bf16.gmra.mrb[0].mxu0 %v267
    %v373 = vpop.f32.mrb[0].mxu0
    %v374 = vadd.f32 %v289, %v373
    %v375 = vpop.f32.mrb[0].mxu0
    %v376 = vpop.f32.mrb[0].mxu0
    %v377 = vpop.f32.mrb[0].mxu0
    %378 = vdwg.mxu0
    %v379 = vpack.c.bf16 %v374, %v374
    %v382 = vunpack.c.l.s4 1966171168
    %v383 = vunpack.c.0.s8 %v382
    %v384 = vlaneseq
    %v385 = vshrl.u32 %v384, 7
    %v386 = vsub.s32 %v383, %v385
    %v387 = vrot.slane %v379, %v386
    %v388 = vcombine.high %v387, %v387
    %v390 = vunpack.c.l.s4 1966171168
    %v391 = vunpack.c.0.s8 %v390
    %v392 = vlaneseq
    %v393 = vshrl.u32 %v392, 7
    %v394 = vsub.s32 %v391, %v393
    %v395 = vrot.slane %v387, %v394
    %v397 = vunpack.c.l.s4 1966171168
    %v398 = vunpack.c.0.s8 %v397
    %v399 = vlaneseq
    %v400 = vshrl.u32 %v399, 7
    %v401 = vsub.s32 %v398, %v400
    %v402 = vrot.slane %v388, %v401
    %v403 = vcombine.high %v395, %v395
    %v404 = vcombine.high %v402, %v402
    %409 = vst [vmem:[#allocation7] sm:$0x1] %v395
    %410 = vst [vmem:[#allocation7 + $0x1] sm:$0x1] %v402
    %411 = vst [vmem:[#allocation7 + $0x2] sm:$0x1] %v403
    %412 = vst [vmem:[#allocation7 + $0x3] sm:$0x1] %v404
    // Predicated region
    $region42: #{dqn_forward.1} parent=1 // pred_check
      _
    $region43: #{dqn_forward.1} parent=1 // pred_check_branch
      %414 = sbr.rel (0) target = $region45
    $region44: #{dqn_forward.1} parent=1 // pred_region
      // Predicated region
      $region46: #{dqn_forward.1} parent=44 // pred_check
        _
      $region47: #{dqn_forward.1} parent=44 // pred_check_branch
        %416 = sbr.rel (0) target = $region49
      $region48: #{dqn_forward.1} parent=44 // pred_region
        // Predicated region
        $region50: #{dqn_forward.1} parent=48 // pred_check
          _
        $region51: #{dqn_forward.1} parent=48 // pred_check_branch
          %418 = sbr.rel target = $region53
        $region52: #{dqn_forward.1} parent=48 // pred_region
          // Predicated region
          $region65: #{dqn_forward.1} parent=52 // pred_check
            _
          $region66: #{dqn_forward.1} parent=52 // pred_check_branch
            %433 = sbr.rel (0) target = $region68
          $region67: #{dqn_forward.1} parent=52 // pred_region
            loop: start=0, step=1, limit=1
            $region69: #{dqn_forward.1} parent=67 // loop_pre_header
              _
            $region70: #{dqn_forward.1} parent=67 // loop_header
              %s436 = sphi 0, %s440
              %p437 = scmp.ge.s32.totalorder %s436, 1
              %s441 = sphi [#allocation7], [#allocation7]
              %s442 = sphi %s7, %s7
            $region71: #{dqn_forward.1} parent=67 // loop_header_branch
              %439 = sbr.rel (%p437) target = $region75
            $region72: #{dqn_forward.1} parent=67 // loop_body
              %v443 = vld [vmem:[%s441] sm:$0x1]
              %444 = vst [vmem:[%s442] sm:$0x1] %v443
            $region73: #{dqn_forward.1} parent=67 // loop_footer
              %s440 = sadd.s32 1, %s436
            $region74: #{dqn_forward.1} parent=67 // loop_footer_branch
              %435 = sbr.rel target = $region70
            $region75: #{dqn_forward.1} parent=67 // loop_exit
              _
          $region68: #{dqn_forward.1} parent=52 // pred_fallthru
            _
        $region53: #{dqn_forward.1} parent=48 // pred_fallthru
          _
        // Predicated region
        $region54: #{dqn_forward.1} parent=48 // pred_check
          _
        $region55: #{dqn_forward.1} parent=48 // pred_check_branch
          %420 = sbr.rel (0) target = $region57
        $region56: #{dqn_forward.1} parent=48 // pred_region
          loop: start=0, step=1, limit=1
          $region58: #{dqn_forward.1} parent=56 // loop_pre_header
            _
          $region59: #{dqn_forward.1} parent=56 // loop_header
            %s423 = sphi 0, %s427
            %p424 = scmp.ge.s32.totalorder %s423, 1
            %s428 = sphi [#allocation7], [#allocation7]
            %s429 = sphi %s7, %s7
          $region60: #{dqn_forward.1} parent=56 // loop_header_branch
            %426 = sbr.rel (%p424) target = $region64
          $region61: #{dqn_forward.1} parent=56 // loop_body
            %v430 = vld [vmem:[%s428] sm:$0x1]
            %431 = vst [vmem:[%s429] sm:$0x1] %v430
          $region62: #{dqn_forward.1} parent=56 // loop_footer
            %s427 = sadd.s32 1, %s423
          $region63: #{dqn_forward.1} parent=56 // loop_footer_branch
            %422 = sbr.rel target = $region59
          $region64: #{dqn_forward.1} parent=56 // loop_exit
            _
        $region57: #{dqn_forward.1} parent=48 // pred_fallthru
          _
      $region49: #{dqn_forward.1} parent=44 // pred_fallthru
        _
      %445 = vnop
    $region45: #{dqn_forward.1} parent=1 // pred_fallthru
      _
    // Predicated region
    $region76: #{dqn_forward.1} parent=1 // pred_check
      _
    $region77: #{dqn_forward.1} parent=1 // pred_check_branch
      %447 = sbr.rel (0) target = $region79
    $region78: #{dqn_forward.1} parent=1 // pred_region
      _
    $region79: #{dqn_forward.1} parent=1 // pred_fallthru
      _
    %448 = vsyncpa [#allocation3], 1
    %449 = vsyncpa [#allocation5], 1

</llo_original>
